<compile_context>
chip_gen: v5e
topology: v5e:2x2
jax: 0.10.0
libtpu: 0.0.40
codegen_flags: <defaults>
</compile_context>

<pallas_src>
import jax
import jax.numpy as jnp
from jax import lax
from jax.experimental import pallas as pl
from jax.experimental.pallas import tpu as pltpu

# ----- model config (CNNDecoder defaults, spatially scaled down) -----
BATCH = 2
LATENT = 32
FEAT_H = FEAT_W = 16          # feature_size
CHANNELS = (1, 1)             # default channels
KSIZE = 5
PAD = 2                       # stride = 1
NEG_SLOPE = 0.01              # nn.LeakyReLU() default

FIN = CHANNELS[0] * FEAT_H * FEAT_W    # flattened FC output / conv input (256)
FOUT = CHANNELS[1] * FEAT_H * FEAT_W   # flattened conv output (256)


def _leaky(x):
    return jnp.where(x >= 0, x, NEG_SLOPE * x)


def _round_up(n, m):
    return ((n + m - 1) // m) * m


# ----------------------- fused Pallas kernel -----------------------

def fused_decoder_kernel(x_ref, wfc_ref, bfc_ref, cmat_ref, bconv_ref, o_ref):
    # x    : (TB, L)      VMEM  batch tile of latents
    # wfc  : (L, FIN)     VMEM  FC weight        (resident across grid)
    # bfc  : (1, FIN)     VMEM  FC bias
    # cmat : (FIN, FOUT)  VMEM  banded ConvTranspose2d matrix (resident)
    # bconv: (1, FOUT)    VMEM  conv bias broadcast per output position
    # o    : (TB, FOUT)   VMEM  lane-dense output tile

    # FC + LeakyReLU -> flattened feature map (MXU GEMM #1)
    img = _leaky(
        jnp.dot(x_ref[...], wfc_ref[...], preferred_element_type=jnp.float32)
        + bfc_ref[...])

    # ConvTranspose2d(k=5, s=1, p=2) as a banded matmul + bias + LeakyReLU
    # (MXU GEMM #2; no scratch, no masks, no cross-lane shuffles).
    out = jnp.dot(img, cmat_ref[...], preferred_element_type=jnp.float32) \
        + bconv_ref[...]
    o_ref[...] = _leaky(out)


# ----------------------- wrapper -----------------------

def _conv_transpose_as_matrix(w_ct):
    """Materialize ConvTranspose2d(k=5, s=1, p=2) as a (FIN, FOUT) matrix.

    ConvTranspose2d with stride 1 / padding p equals a regular conv with the
    spatially flipped kernel and padding k-1-p (=2 here).  Since that map is
    linear, pushing the identity basis through it yields M with
    out_flat = img_flat @ M.
    """
    w_flip = jnp.flip(w_ct, axis=(-2, -1))                 # (C_in, C_out, K, K)
    w_oihw = jnp.transpose(w_flip, (1, 0, 2, 3))           # (O, I, K, K)
    eye_imgs = jnp.eye(FIN, dtype=jnp.float32).reshape(
        FIN, CHANNELS[0], FEAT_H, FEAT_W)
    basis_out = lax.conv_general_dilated(
        eye_imgs, w_oihw, window_strides=(1, 1),
        padding=[(PAD, PAD), (PAD, PAD)],
        dimension_numbers=("NCHW", "OIHW", "NCHW"))
    return basis_out.reshape(FIN, FOUT)


def cnn_decoder_forward(x, w_fc, b_fc, w_ct, b_ct):
    B, L = x.shape

    # Wrapper-side, done once per call (linear-algebra / layout plumbing only).
    conv_mat = _conv_transpose_as_matrix(w_ct)                       # (FIN, FOUT)
    b_conv = jnp.repeat(b_ct, FEAT_H * FEAT_W).reshape(1, FOUT)      # per-position bias

    # Pad batch to a full f32 sublane tile so vregs / stores are unmasked,
    # then tile the (parallel) batch axis.  Weights stay resident (block 0).
    tile_b = min(256, _round_up(B, 8))
    bp = _round_up(B, tile_b)
    x_p = jnp.pad(x, ((0, bp - B), (0, 0)))

    cost = pl.CostEstimate(
        flops=2 * bp * L * FIN + 2 * bp * FIN * FOUT,
        transcendentals=0,
        bytes_accessed=4 * (bp * L + L * FIN + FIN + FIN * FOUT + FOUT + bp * FOUT),
    )

    out_flat = pl.pallas_call(
        fused_decoder_kernel,
        out_shape=jax.ShapeDtypeStruct((bp, FOUT), jnp.float32),
        grid_spec=pltpu.PrefetchScalarGridSpec(
            num_scalar_prefetch=0,
            grid=(bp // tile_b,),
            in_specs=[
                pl.BlockSpec((tile_b, L), lambda i: (i, 0)),   # x: tiled over batch
                pl.BlockSpec((L, FIN), lambda i: (0, 0)),      # w_fc: resident
                pl.BlockSpec((1, FIN), lambda i: (0, 0)),      # b_fc: resident
                pl.BlockSpec((FIN, FOUT), lambda i: (0, 0)),   # conv matrix: resident
                pl.BlockSpec((1, FOUT), lambda i: (0, 0)),     # conv bias: resident
            ],
            out_specs=pl.BlockSpec((tile_b, FOUT), lambda i: (i, 0)),
        ),
        compiler_params=pltpu.CompilerParams(
            dimension_semantics=("parallel",)),
        cost_estimate=cost,
    )(x_p, w_fc, b_fc.reshape(1, FIN), conv_mat, b_conv)

    # layout plumbing only: drop batch padding, back to NCHW (B, C1, H, W)
    return out_flat[:B].reshape(B, CHANNELS[1], FEAT_H, FEAT_W)


# ----------------------- pure-JAX reference -----------------------

def reference_forward(x, w_fc, b_fc, w_ct, b_ct):
    y = _leaky(x @ w_fc + b_fc)
    img = y.reshape(x.shape[0], CHANNELS[0], FEAT_H, FEAT_W)
    w_flip = w_ct[0, 0, ::-1, ::-1][None, None]           # (O=1, I=1, K, K)
    out = lax.conv_general_dilated(
        img, w_flip, window_strides=(1, 1),
        padding=[(PAD, PAD), (PAD, PAD)],
        dimension_numbers=("NCHW", "OIHW", "NCHW"))
    out = out + b_ct[None, :, None, None]
    return _leaky(out)


if __name__ == "__main__":
    key = jax.random.PRNGKey(0)
    k1, k2, k3, k4, k5 = jax.random.split(key, 5)

    # Deterministic synthetic params (PyTorch-style uniform fan-in init).
    lim_fc = 1.0 / jnp.sqrt(jnp.float32(LATENT))
    w_fc = jax.random.uniform(k1, (LATENT, FIN), jnp.float32, -lim_fc, lim_fc)
    b_fc = jax.random.uniform(k2, (FIN,), jnp.float32, -lim_fc, lim_fc)

    lim_ct = 1.0 / jnp.sqrt(jnp.float32(CHANNELS[0] * KSIZE * KSIZE))
    w_ct = jax.random.uniform(
        k3, (CHANNELS[0], CHANNELS[1], KSIZE, KSIZE), jnp.float32, -lim_ct, lim_ct)
    b_ct = jax.random.uniform(k4, (CHANNELS[1],), jnp.float32, -lim_ct, lim_ct)

    x = jax.random.normal(k5, (BATCH, LATENT), dtype=jnp.float32)

    fwd = jax.jit(cnn_decoder_forward)
    out = jax.block_until_ready(fwd(x, w_fc, b_fc, w_ct, b_ct))

    ref = reference_forward(x, w_fc, b_fc, w_ct, b_ct)
    assert out.shape == (BATCH, CHANNELS[1], FEAT_H, FEAT_W)
    # Tolerance leaves margin for matmul-vs-conv reassociation (all f32).
    assert jnp.allclose(out, ref, atol=1e-4, rtol=1e-4), "mismatch vs reference"

    print("KERNEL_OK")
</pallas_src>

<mosaic_0001>
module attributes {stable_mosaic.version = 11 : i64} {
  func.func @fused_decoder_kernel(%arg0: i32, %arg1: memref<8x32xf32, #tpu.memory_space<vmem>>, %arg2: memref<32x256xf32, #tpu.memory_space<vmem>>, %arg3: memref<1x256xf32, #tpu.memory_space<vmem>>, %arg4: memref<256x256xf32, #tpu.memory_space<vmem>>, %arg5: memref<1x256xf32, #tpu.memory_space<vmem>>, %arg6: memref<8x256xf32, #tpu.memory_space<vmem>>) attributes {dimension_semantics = [#tpu.dimension_semantics<parallel>], iteration_bounds = array<i64: 1>, scalar_prefetch = 0 : i64, scratch_operands = 0 : i64, tpu.core_type = #tpu.core_type<tc>, window_params = [{transform_indices = @transform_0, window_bounds = array<i64: 8, 32>}, {pipeline_mode = #tpu.pipeline_mode<synchronous>, transform_indices = @transform_1, window_bounds = array<i64: 32, 256>}, {pipeline_mode = #tpu.pipeline_mode<synchronous>, transform_indices = @transform_2, window_bounds = array<i64: 1, 256>}, {pipeline_mode = #tpu.pipeline_mode<synchronous>, transform_indices = @transform_3, window_bounds = array<i64: 256, 256>}, {pipeline_mode = #tpu.pipeline_mode<synchronous>, transform_indices = @transform_4, window_bounds = array<i64: 1, 256>}, {transform_indices = @transform_5, window_bounds = array<i64: 8, 256>}]} {
    %c0 = arith.constant 0 : index
    %c0_0 = arith.constant 0 : index
    %0 = vector.load %arg1[%c0, %c0_0] : memref<8x32xf32, #tpu.memory_space<vmem>>, vector<8x32xf32>
    %c0_1 = arith.constant 0 : index
    %c0_2 = arith.constant 0 : index
    %1 = vector.load %arg2[%c0_1, %c0_2] : memref<32x256xf32, #tpu.memory_space<vmem>>, vector<32x256xf32>
    %cst = arith.constant dense<0.000000e+00> : vector<8x256xf32>
    %2 = tpu.matmul %0, %1, %cst {dimension_numbers = #tpu.dot_dimension_numbers<[1], [0], [0], [1], [0, 0, 1, 1], [], []>} : vector<8x32xf32>, vector<32x256xf32>, vector<8x256xf32> -> vector<8x256xf32>
    %c0_3 = arith.constant 0 : index
    %c0_4 = arith.constant 0 : index
    %3 = vector.load %arg3[%c0_3, %c0_4] : memref<1x256xf32, #tpu.memory_space<vmem>>, vector<1x256xf32>
    %4 = vector.broadcast %3 : vector<1x256xf32> to vector<8x256xf32>
    %5 = arith.addf %2, %4 : vector<8x256xf32>
    %cst_5 = arith.constant 0.000000e+00 : f32
    %6 = vector.broadcast %cst_5 : f32 to vector<8x256xf32>
    %7 = arith.cmpf oge, %5, %6 : vector<8x256xf32>
    %cst_6 = arith.constant 0.00999999977 : f32
    %8 = vector.broadcast %cst_6 : f32 to vector<8x256xf32>
    %9 = arith.mulf %8, %5 : vector<8x256xf32>
    %10 = arith.select %7, %5, %9 : vector<8x256xi1>, vector<8x256xf32>
    %c0_7 = arith.constant 0 : index
    %c0_8 = arith.constant 0 : index
    %11 = vector.load %arg4[%c0_7, %c0_8] : memref<256x256xf32, #tpu.memory_space<vmem>>, vector<256x256xf32>
    %cst_9 = arith.constant dense<0.000000e+00> : vector<8x256xf32>
    %12 = tpu.matmul %10, %11, %cst_9 {dimension_numbers = #tpu.dot_dimension_numbers<[1], [0], [0], [1], [0, 0, 1, 1], [], []>} : vector<8x256xf32>, vector<256x256xf32>, vector<8x256xf32> -> vector<8x256xf32>
    %c0_10 = arith.constant 0 : index
    %c0_11 = arith.constant 0 : index
    %13 = vector.load %arg5[%c0_10, %c0_11] : memref<1x256xf32, #tpu.memory_space<vmem>>, vector<1x256xf32>
    %14 = vector.broadcast %13 : vector<1x256xf32> to vector<8x256xf32>
    %15 = arith.addf %12, %14 : vector<8x256xf32>
    %cst_12 = arith.constant 0.000000e+00 : f32
    %16 = vector.broadcast %cst_12 : f32 to vector<8x256xf32>
    %17 = arith.cmpf oge, %15, %16 : vector<8x256xf32>
    %cst_13 = arith.constant 0.00999999977 : f32
    %18 = vector.broadcast %cst_13 : f32 to vector<8x256xf32>
    %19 = arith.mulf %18, %15 : vector<8x256xf32>
    %20 = arith.select %17, %15, %19 : vector<8x256xi1>, vector<8x256xf32>
    %c0_14 = arith.constant 0 : index
    %c0_15 = arith.constant 0 : index
    %21 = vector.load %arg6[%c0_14, %c0_15] : memref<8x256xf32, #tpu.memory_space<vmem>>, vector<8x256xf32>
    tpu.vector_store %arg6[%c0_14, %c0_15], %20 {strides = array<i32>} : memref<8x256xf32, #tpu.memory_space<vmem>>, vector<8x256xf32>,
    return
  }
  func.func @transform_0(%arg0: i32) -> (i32, i32) {
    %c0_i32 = arith.constant 0 : i32
    %c0_i32_0 = arith.constant 0 : i32
    return %arg0, %c0_i32 : i32, i32
  }
  func.func @transform_1(%arg0: i32) -> (i32, i32) {
    %c0_i32 = arith.constant 0 : i32
    %c0_i32_0 = arith.constant 0 : i32
    %c0_i32_1 = arith.constant 0 : i32
    return %c0_i32, %c0_i32_0 : i32, i32
  }
  func.func @transform_2(%arg0: i32) -> (i32, i32) {
    %c0_i32 = arith.constant 0 : i32
    %c0_i32_0 = arith.constant 0 : i32
    %c0_i32_1 = arith.constant 0 : i32
    return %c0_i32, %c0_i32_0 : i32, i32
  }
  func.func @transform_3(%arg0: i32) -> (i32, i32) {
    %c0_i32 = arith.constant 0 : i32
    %c0_i32_0 = arith.constant 0 : i32
    %c0_i32_1 = arith.constant 0 : i32
    return %c0_i32, %c0_i32_0 : i32, i32
  }
  func.func @transform_4(%arg0: i32) -> (i32, i32) {
    %c0_i32 = arith.constant 0 : i32
    %c0_i32_0 = arith.constant 0 : i32
    %c0_i32_1 = arith.constant 0 : i32
    return %c0_i32, %c0_i32_0 : i32, i32
  }
  func.func @transform_5(%arg0: i32) -> (i32, i32) {
    %c0_i32 = arith.constant 0 : i32
    %c0_i32_0 = arith.constant 0 : i32
    return %arg0, %c0_i32 : i32, i32
  }
}

</mosaic_0001>

<llo_original>
// kernel: cnn_decoder_forward.1
$region0: #{cnn_decoder_forward.1}
  #allocation0 [shape = 'u32[]', space=smem, size = 0x4, offset = 0x4, fixed_abs, tag = 'smem constant byte address 0x4 - core index']
  #allocation1 [shape = 'u32[72,128]{1,0:T(1,128)}', space=vmem, size = 0x9000, scoped, tag = 'internal scratch']
  %s0 = inlined_call_operand.vmem [shape: f32[8,32], index: 0, kind: input, shape index: {}]
  %s1 = inlined_call_operand.vmem [shape: f32[32,256], index: 1, kind: input, shape index: {}]
  %s2 = inlined_call_operand.vmem [shape: f32[1,256], index: 2, kind: input, shape index: {}]
  %s3 = inlined_call_operand.vmem [shape: f32[256,256], index: 3, kind: input, shape index: {}]
  %s4 = inlined_call_operand.vmem [shape: f32[1,256], index: 4, kind: input, shape index: {}]
  %s5 = inlined_call_operand.vmem [shape: f32[8,256], index: 5, kind: output, shape index: {}]
  %s6 = sld [smem:[#allocation0]]
  $region30: #{cnn_decoder_forward.1} parent=0
    _
  %s8 = ssub.s32 1, %s6
  %s9 = scalar_select 0, %s8, %s6
  // Predicated region
  $region2: #{cnn_decoder_forward.1} parent=0 // pred_check
    _
  $region3: #{cnn_decoder_forward.1} parent=0 // pred_check_branch
    %11 = sbr.rel (0) target = $region5
  $region4: #{cnn_decoder_forward.1} parent=0 // pred_region
    _
  $region5: #{cnn_decoder_forward.1} parent=0 // pred_fallthru
    _
  // Predicated region
  $region6: #{cnn_decoder_forward.1} parent=0 // pred_check
    _
  $region7: #{cnn_decoder_forward.1} parent=0 // pred_check_branch
    %13 = sbr.rel (0) target = $region9
  $region8: #{cnn_decoder_forward.1} parent=0 // pred_region
    _
  $region9: #{cnn_decoder_forward.1} parent=0 // pred_fallthru
    _
  // Predicated region
  $region10: #{cnn_decoder_forward.1} parent=0 // pred_check
    _
  $region11: #{cnn_decoder_forward.1} parent=0 // pred_check_branch
    %15 = sbr.rel (0) target = $region13
  $region12: #{cnn_decoder_forward.1} parent=0 // pred_region
    _
  $region13: #{cnn_decoder_forward.1} parent=0 // pred_fallthru
    _
  // Predicated region
  $region14: #{cnn_decoder_forward.1} parent=0 // pred_check
    _
  $region15: #{cnn_decoder_forward.1} parent=0 // pred_check_branch
    %17 = sbr.rel (0) target = $region17
  $region16: #{cnn_decoder_forward.1} parent=0 // pred_region
    _
  $region17: #{cnn_decoder_forward.1} parent=0 // pred_fallthru
    _
  // Predicated region
  $region18: #{cnn_decoder_forward.1} parent=0 // pred_check
    _
  $region19: #{cnn_decoder_forward.1} parent=0 // pred_check_branch
    %19 = sbr.rel (0) target = $region21
  $region20: #{cnn_decoder_forward.1} parent=0 // pred_region
    _
  $region21: #{cnn_decoder_forward.1} parent=0 // pred_fallthru
    _
  %v20 = vld [vmem:[%s0] sm:$0xff]
  %v21 = vld [vmem:[%s1] sm:$0xff]
  %v22 = vld [vmem:[%s1 + $0x8] sm:$0xff]
  %v23 = vld [vmem:[%s1 + $0x10] sm:$0xff]
  %v24 = vld [vmem:[%s1 + $0x18] sm:$0xff]
  %v25 = vld [vmem:[%s1 + $0x20] sm:$0xff]
  %v26 = vld [vmem:[%s1 + $0x28] sm:$0xff]
  %v27 = vld [vmem:[%s1 + $0x30] sm:$0xff]
  %v28 = vld [vmem:[%s1 + $0x38] sm:$0xff]
  %v29 = vld [vmem:[%s2] sm:$0x3]
  %v31 = vperm.slane %v29, 0
  %v32 = vperm.slane %v29, 1
  %vm35 = vcmask 261120
  %v37 = vsel %vm35, %v20, 0
  %39 = vmatpush.msra.mxu0 0.0
  %40 = vmatpush.msra.mxu0 0.0
  %41 = vmatpush.msra.mxu0 0.0
  %42 = vmatpush.msra.mxu0 0.0
  %43 = vmatpush.msra.mxu0 0.0
  %44 = vmatpush.msra.mxu0 0.0
  %45 = vmatpush.msra.mxu0 0.0
  %46 = vmatpush.msra.mxu0 0.0
  %47 = vmatpush.msra.mxu0 0.0
  %48 = vmatpush.msra.mxu0 0.0
  %49 = vmatpush.msra.mxu0 0.0
  %50 = vmatpush.msra.mxu0 0.0
  %51 = vmatpush.msra.mxu0 %v27
  %52 = vmatpush.msra.mxu0 %v25
  %53 = vmatpush.msra.mxu0 %v23
  %54 = vmatpush.msra.mxu0 %v21
  %55 = vmatmul.f32.gmra.mxu0 %v37
  %v56 = vpop.f32.mrf.mxu0
  %v57 = vadd.f32 %v31, %v56
  %58 = vdwg.mxu0
  %59 = vmatpush.msra.mxu0 0.0
  %60 = vmatpush.msra.mxu0 0.0
  %61 = vmatpush.msra.mxu0 0.0
  %62 = vmatpush.msra.mxu0 0.0
  %63 = vmatpush.msra.mxu0 0.0
  %64 = vmatpush.msra.mxu0 0.0
  %65 = vmatpush.msra.mxu0 0.0
  %66 = vmatpush.msra.mxu0 0.0
  %67 = vmatpush.msra.mxu0 0.0
  %68 = vmatpush.msra.mxu0 0.0
  %69 = vmatpush.msra.mxu0 0.0
  %70 = vmatpush.msra.mxu0 0.0
  %71 = vmatpush.msra.mxu0 %v28
  %72 = vmatpush.msra.mxu0 %v26
  %73 = vmatpush.msra.mxu0 %v24
  %74 = vmatpush.msra.mxu0 %v22
  %75 = vmatmul.f32.gmra.mxu0 %v37
  %v76 = vpop.f32.mrf.mxu0
  %v77 = vadd.f32 %v32, %v76
  %78 = vdwg.mxu0
  %vm79 = vcmp.ge.f32.partialorder %v57, 0.0
  %vm80 = vcmp.ge.f32.partialorder %v77, 0.0
  %v81 = vmul.f32 %v57, 0.01
  %v82 = vmul.f32 %v77, 0.01
  %v83 = vsel %vm79, %v57, %v81
  %v84 = vsel %vm80, %v77, %v82
  %v85 = vld [vmem:[%s3] sm:$0xff]
  %v86 = vld [vmem:[%s3 + $0x8] sm:$0xff]
  %v87 = vld [vmem:[%s3 + $0x10] sm:$0xff]
  %v88 = vld [vmem:[%s3 + $0x18] sm:$0xff]
  %v89 = vld [vmem:[%s3 + $0x20] sm:$0xff]
  %v90 = vld [vmem:[%s3 + $0x28] sm:$0xff]
  %v91 = vld [vmem:[%s3 + $0x30] sm:$0xff]
  %v92 = vld [vmem:[%s3 + $0x38] sm:$0xff]
  %v93 = vld [vmem:[%s3 + $0x40] sm:$0xff]
  %v94 = vld [vmem:[%s3 + $0x48] sm:$0xff]
  %v95 = vld [vmem:[%s3 + $0x50] sm:$0xff]
  %v96 = vld [vmem:[%s3 + $0x58] sm:$0xff]
  %v97 = vld [vmem:[%s3 + $0x60] sm:$0xff]
  %v98 = vld [vmem:[%s3 + $0x68] sm:$0xff]
  %v99 = vld [vmem:[%s3 + $0x70] sm:$0xff]
  %v100 = vld [vmem:[%s3 + $0x78] sm:$0xff]
  %v101 = vld [vmem:[%s3 + $0x80] sm:$0xff]
  %v102 = vld [vmem:[%s3 + $0x88] sm:$0xff]
  %v103 = vld [vmem:[%s3 + $0x90] sm:$0xff]
  %v104 = vld [vmem:[%s3 + $0x98] sm:$0xff]
  %v105 = vld [vmem:[%s3 + $0xa0] sm:$0xff]
  %v106 = vld [vmem:[%s3 + $0xa8] sm:$0xff]
  %v107 = vld [vmem:[%s3 + $0xb0] sm:$0xff]
  %v108 = vld [vmem:[%s3 + $0xb8] sm:$0xff]
  %v109 = vld [vmem:[%s3 + $0xc0] sm:$0xff]
  %v110 = vld [vmem:[%s3 + $0xc8] sm:$0xff]
  %v111 = vld [vmem:[%s3 + $0xd0] sm:$0xff]
  %v112 = vld [vmem:[%s3 + $0xd8] sm:$0xff]
  %v113 = vld [vmem:[%s3 + $0xe0] sm:$0xff]
  %v114 = vld [vmem:[%s3 + $0xe8] sm:$0xff]
  %v115 = vld [vmem:[%s3 + $0xf0] sm:$0xff]
  %v116 = vld [vmem:[%s3 + $0xf8] sm:$0xff]
  %v117 = vld [vmem:[%s3 + $0x100] sm:$0xff]
  %v118 = vld [vmem:[%s3 + $0x108] sm:$0xff]
  %v119 = vld [vmem:[%s3 + $0x110] sm:$0xff]
  %v120 = vld [vmem:[%s3 + $0x118] sm:$0xff]
  %v121 = vld [vmem:[%s3 + $0x120] sm:$0xff]
  %v122 = vld [vmem:[%s3 + $0x128] sm:$0xff]
  %v123 = vld [vmem:[%s3 + $0x130] sm:$0xff]
  %v124 = vld [vmem:[%s3 + $0x138] sm:$0xff]
  %v125 = vld [vmem:[%s3 + $0x140] sm:$0xff]
  %v126 = vld [vmem:[%s3 + $0x148] sm:$0xff]
  %v127 = vld [vmem:[%s3 + $0x150] sm:$0xff]
  %v128 = vld [vmem:[%s3 + $0x158] sm:$0xff]
  %v129 = vld [vmem:[%s3 + $0x160] sm:$0xff]
  %v130 = vld [vmem:[%s3 + $0x168] sm:$0xff]
  %v131 = vld [vmem:[%s3 + $0x170] sm:$0xff]
  %v132 = vld [vmem:[%s3 + $0x178] sm:$0xff]
  %v133 = vld [vmem:[%s3 + $0x180] sm:$0xff]
  %v134 = vld [vmem:[%s3 + $0x188] sm:$0xff]
  %v135 = vld [vmem:[%s3 + $0x190] sm:$0xff]
  %v136 = vld [vmem:[%s3 + $0x198] sm:$0xff]
  %v137 = vld [vmem:[%s3 + $0x1a0] sm:$0xff]
  %v138 = vld [vmem:[%s3 + $0x1a8] sm:$0xff]
  %v139 = vld [vmem:[%s3 + $0x1b0] sm:$0xff]
  %v140 = vld [vmem:[%s3 + $0x1b8] sm:$0xff]
  %v141 = vld [vmem:[%s3 + $0x1c0] sm:$0xff]
  %v142 = vld [vmem:[%s3 + $0x1c8] sm:$0xff]
  %v143 = vld [vmem:[%s3 + $0x1d0] sm:$0xff]
  %v144 = vld [vmem:[%s3 + $0x1d8] sm:$0xff]
  %v145 = vld [vmem:[%s3 + $0x1e0] sm:$0xff]
  %v146 = vld [vmem:[%s3 + $0x1e8] sm:$0xff]
  %v147 = vld [vmem:[%s3 + $0x1f0] sm:$0xff]
  %v148 = vld [vmem:[%s3 + $0x1f8] sm:$0xff]
  %v149 = vld [vmem:[%s4] sm:$0x3]
  %v151 = vperm.slane %v149, 0
  %v152 = vperm.slane %v149, 1
  %155 = vmatpush.msra.mxu0 %v115
  %156 = vmatpush.msra.mxu0 %v113
  %157 = vmatpush.msra.mxu0 %v111
  %158 = vmatpush.msra.mxu0 %v109
  %159 = vmatpush.msra.mxu0 %v107
  %160 = vmatpush.msra.mxu0 %v105
  %161 = vmatpush.msra.mxu0 %v103
  %162 = vmatpush.msra.mxu0 %v101
  %163 = vmatpush.msra.mxu0 %v99
  %164 = vmatpush.msra.mxu0 %v97
  %165 = vmatpush.msra.mxu0 %v95
  %166 = vmatpush.msra.mxu0 %v93
  %167 = vmatpush.msra.mxu0 %v91
  %168 = vmatpush.msra.mxu0 %v89
  %169 = vmatpush.msra.mxu0 %v87
  %170 = vmatpush.msra.mxu0 %v85
  %171 = vmatmul.f32.gmra.mxu0 %v83
  %v172 = vpop.f32.mrf.mxu0
  %v173 = vadd.f32 %v151, %v172
  %174 = vdwg.mxu0
  %175 = vmatpush.msra.mxu0 %v147
  %176 = vmatpush.msra.mxu0 %v145
  %177 = vmatpush.msra.mxu0 %v143
  %178 = vmatpush.msra.mxu0 %v141
  %179 = vmatpush.msra.mxu0 %v139
  %180 = vmatpush.msra.mxu0 %v137
  %181 = vmatpush.msra.mxu0 %v135
  %182 = vmatpush.msra.mxu0 %v133
  %183 = vmatpush.msra.mxu0 %v131
  %184 = vmatpush.msra.mxu0 %v129
  %185 = vmatpush.msra.mxu0 %v127
  %186 = vmatpush.msra.mxu0 %v125
  %187 = vmatpush.msra.mxu0 %v123
  %188 = vmatpush.msra.mxu0 %v121
  %189 = vmatpush.msra.mxu0 %v119
  %190 = vmatpush.msra.mxu0 %v117
  %191 = vmatmul.f32.gmra.mxu0 %v84
  %v192 = vpop.f32.mrf.mxu0
  %v193 = vadd.f32 %v173, %v192
  %194 = vdwg.mxu0
  %195 = vmatpush.msra.mxu0 %v116
  %196 = vmatpush.msra.mxu0 %v114
  %197 = vmatpush.msra.mxu0 %v112
  %198 = vmatpush.msra.mxu0 %v110
  %199 = vmatpush.msra.mxu0 %v108
  %200 = vmatpush.msra.mxu0 %v106
  %201 = vmatpush.msra.mxu0 %v104
  %202 = vmatpush.msra.mxu0 %v102
  %203 = vmatpush.msra.mxu0 %v100
  %204 = vmatpush.msra.mxu0 %v98
  %205 = vmatpush.msra.mxu0 %v96
  %206 = vmatpush.msra.mxu0 %v94
  %207 = vmatpush.msra.mxu0 %v92
  %208 = vmatpush.msra.mxu0 %v90
  %209 = vmatpush.msra.mxu0 %v88
  %210 = vmatpush.msra.mxu0 %v86
  %211 = vmatmul.f32.gmra.mxu0 %v83
  %v212 = vpop.f32.mrf.mxu0
  %v213 = vadd.f32 %v152, %v212
  %214 = vdwg.mxu0
  %215 = vmatpush.msra.mxu0 %v148
  %216 = vmatpush.msra.mxu0 %v146
  %217 = vmatpush.msra.mxu0 %v144
  %218 = vmatpush.msra.mxu0 %v142
  %219 = vmatpush.msra.mxu0 %v140
  %220 = vmatpush.msra.mxu0 %v138
  %221 = vmatpush.msra.mxu0 %v136
  %222 = vmatpush.msra.mxu0 %v134
  %223 = vmatpush.msra.mxu0 %v132
  %224 = vmatpush.msra.mxu0 %v130
  %225 = vmatpush.msra.mxu0 %v128
  %226 = vmatpush.msra.mxu0 %v126
  %227 = vmatpush.msra.mxu0 %v124
  %228 = vmatpush.msra.mxu0 %v122
  %229 = vmatpush.msra.mxu0 %v120
  %230 = vmatpush.msra.mxu0 %v118
  %231 = vmatmul.f32.gmra.mxu0 %v84
  %v232 = vpop.f32.mrf.mxu0
  %v233 = vadd.f32 %v213, %v232
  %234 = vdwg.mxu0
  %vm235 = vcmp.ge.f32.partialorder %v193, 0.0
  %vm236 = vcmp.ge.f32.partialorder %v233, 0.0
  %v237 = vmul.f32 %v193, 0.01
  %v238 = vmul.f32 %v233, 0.01
  %v239 = vsel %vm235, %v193, %v237
  %v240 = vsel %vm236, %v233, %v238
  %241 = vst [vmem:[%s5] sm:$0xff] %v239
  %242 = vst [vmem:[%s5 + $0x8] sm:$0xff] %v240
  // Predicated region
  $region22: #{cnn_decoder_forward.1} parent=0 // pred_check
    _
  $region23: #{cnn_decoder_forward.1} parent=0 // pred_check_branch
    %244 = sbr.rel (0) target = $region25
  $region24: #{cnn_decoder_forward.1} parent=0 // pred_region
    _
  $region25: #{cnn_decoder_forward.1} parent=0 // pred_fallthru
    _
  // Predicated region
  $region26: #{cnn_decoder_forward.1} parent=0 // pred_check
    _
  $region27: #{cnn_decoder_forward.1} parent=0 // pred_check_branch
    %246 = sbr.rel (0) target = $region29
  $region28: #{cnn_decoder_forward.1} parent=0 // pred_region
    _
  $region29: #{cnn_decoder_forward.1} parent=0 // pred_fallthru
    _

</llo_original>
